<compile_context>
chip_gen: v7x
topology: tpu7x:2x2x1
jax: 0.10.0
libtpu: 0.0.40
codegen_flags: <defaults>
</compile_context>

<pallas_src>
import functools

import jax
import jax.numpy as jnp
from jax.experimental import pallas as pl
from jax.experimental.pallas import tpu as pltpu

EPS = 1e-5  # nn.InstanceNorm2d default (affine=False, biased variance)


def _instance_norm_rows(a):
    # a: (C, HW) -> per-channel normalization over all spatial positions.
    mean = jnp.mean(a, axis=1, keepdims=True)
    var = jnp.mean((a - mean) ** 2, axis=1, keepdims=True)
    return (a - mean) * jax.lax.rsqrt(var + EPS)


def resblock_kernel(x_ref, masks_ref, w1_ref, w2_ref, o_ref, *, H, W):
    # x_ref    : (1, C, HW)   channels on sublanes, flattened spatial on lanes
    # masks_ref: (9*C, HW)    0/1 per-tap validity mask (row t*C + c is tap t)
    # w*_ref   : (C, 9*C)     weights packed as w_packed[o, (kh*3+kw)*C + i]
    # o_ref    : (1, C, HW)
    HW = H * W

    x = x_ref[0].astype(jnp.float32)          # (C, HW)
    tap_masks = masks_ref[...]                # (9*C, HW)
    w1 = w1_ref[...].astype(jnp.float32)      # (C, 9*C)
    w2 = w2_ref[...].astype(jnp.float32)

    def conv3x3(a, w_packed):
        # Tap (kh, kw) with dh = kh-1, dw = kw-1 needs shifted[k] = a[k + dh*W + dw]
        # (zeroed where the window falls off the image -- handled by tap_masks,
        # which also kills the wrap-around rows/cols of the roll).
        # jnp.roll semantics: roll(a, s)[k] = a[k - s], so shift = -d.
        parts = []
        for kh in range(3):
            for kw in range(3):
                d = (kh - 1) * W + (kw - 1)
                parts.append(a if d == 0 else pltpu.roll(a, (-d) % HW, axis=1))
        col = jnp.concatenate(parts, axis=0) * tap_masks        # (9*C, HW)
        return jnp.dot(w_packed, col,                           # (C, HW)
                       preferred_element_type=jnp.float32)

    out = jnp.maximum(_instance_norm_rows(conv3x3(x, w1)), 0.0)   # conv1+IN+ReLU
    out = _instance_norm_rows(conv3x3(out, w2))                   # conv2+IN
    o_ref[0] = jnp.maximum(out + x, 0.0).astype(o_ref.dtype)      # +x, ReLU


def resblock_pallas(x_nchw, w1_oihw, w2_oihw):
    """x_nchw: (N, C, H, W) float32; weights OIHW (C, C, 3, 3), bias=False."""
    N, C, H, W = x_nchw.shape
    HW = H * W

    x = x_nchw.reshape(N, C, HW)  # contiguous reshape: no data movement

    def pack(w):
        # OIHW -> (C_out, 9*C_in), tap-major: w_packed[o, (kh*3+kw)*C + i]
        return jnp.transpose(w, (0, 2, 3, 1)).reshape(C, 9 * C)

    w1p = pack(w1_oihw)
    w2p = pack(w2_oihw)

    # Per-tap validity masks over the flattened spatial index, built once in the
    # wrapper (tiny) and pre-broadcast over channels to (9*C, HW) so the kernel
    # applies them with a single lane-dense multiply.
    row = jnp.repeat(jnp.arange(H), W)        # (HW,)  row index of flat k
    col = jnp.tile(jnp.arange(W), H)          # (HW,)  col index of flat k
    mask_list = []
    for kh in range(3):
        for kw in range(3):
            dh, dw = kh - 1, kw - 1
            valid = ((row + dh >= 0) & (row + dh < H) &
                     (col + dw >= 0) & (col + dw < W))
            mask_list.append(valid)
    masks = jnp.stack(mask_list, axis=0).astype(jnp.float32)    # (9, HW)
    masks = jnp.repeat(masks, C, axis=0)                        # (9*C, HW)

    kernel = functools.partial(resblock_kernel, H=H, W=W)

    out = pl.pallas_call(
        kernel,
        out_shape=jax.ShapeDtypeStruct((N, C, HW), x_nchw.dtype),
        grid_spec=pltpu.PrefetchScalarGridSpec(
            num_scalar_prefetch=0,
            grid=(N,),
            in_specs=[
                pl.BlockSpec((1, C, HW), lambda n: (n, 0, 0)),
                pl.BlockSpec((9 * C, HW), lambda n: (0, 0)),   # fetched once
                pl.BlockSpec((C, 9 * C), lambda n: (0, 0)),    # fetched once
                pl.BlockSpec((C, 9 * C), lambda n: (0, 0)),    # fetched once
            ],
            out_specs=pl.BlockSpec((1, C, HW), lambda n: (n, 0, 0)),
        ),
        compiler_params=pltpu.CompilerParams(
            dimension_semantics=("parallel",)),
    )(x, masks, w1p, w2p)

    return out.reshape(N, C, H, W)


def resblock_ref(x_nchw, w1_oihw, w2_oihw):
    """Pure-JAX reference matching the PyTorch module semantics."""
    def conv(x, w):
        return jax.lax.conv_general_dilated(
            x, w, window_strides=(1, 1), padding="SAME",
            dimension_numbers=("NCHW", "OIHW", "NCHW"))

    def inorm(x):
        m = jnp.mean(x, axis=(2, 3), keepdims=True)
        v = jnp.mean((x - m) ** 2, axis=(2, 3), keepdims=True)
        return (x - m) / jnp.sqrt(v + EPS)

    out = jnp.maximum(inorm(conv(x_nchw, w1_oihw)), 0.0)
    out = inorm(conv(out, w2_oihw))
    return jnp.maximum(out + x_nchw, 0.0)


if __name__ == "__main__":
    # Small, deterministic example consistent with ResBlock(ncf=4).
    N, C, H, W = 2, 4, 16, 16
    key = jax.random.PRNGKey(0)
    kx, k1, k2 = jax.random.split(key, 3)

    x = jax.random.normal(kx, (N, C, H, W), jnp.float32)
    # Deterministic synthetic conv weights (bias=False in the module).
    w1 = 0.1 * jax.random.normal(k1, (C, C, 3, 3), jnp.float32)
    w2 = 0.1 * jax.random.normal(k2, (C, C, 3, 3), jnp.float32)

    out = jax.block_until_ready(resblock_pallas(x, w1, w2))
    ref = jax.block_until_ready(resblock_ref(x, w1, w2))

    assert out.shape == (N, C, H, W)
    assert jnp.allclose(out, ref, atol=1e-4, rtol=1e-4), (
        float(jnp.max(jnp.abs(out - ref))))

    print("KERNEL_OK")
</pallas_src>

<mosaic_0001>
module attributes {stable_mosaic.version = 11 : i64} {
  func.func @resblock_kernel(%arg0: i32, %arg1: memref<1x4x256xf32, #tpu.memory_space<vmem>>, %arg2: memref<36x256xf32, #tpu.memory_space<vmem>>, %arg3: memref<4x36xf32, #tpu.memory_space<vmem>>, %arg4: memref<4x36xf32, #tpu.memory_space<vmem>>, %arg5: memref<1x4x256xf32, #tpu.memory_space<vmem>>) attributes {dimension_semantics = [#tpu.dimension_semantics<parallel>], iteration_bounds = array<i64: 2>, scalar_prefetch = 0 : i64, scratch_operands = 0 : i64, tpu.core_type = #tpu.core_type<tc>, window_params = [{transform_indices = @transform_0, window_bounds = array<i64: 1, 4, 256>}, {pipeline_mode = #tpu.pipeline_mode<synchronous>, transform_indices = @transform_1, window_bounds = array<i64: 36, 256>}, {pipeline_mode = #tpu.pipeline_mode<synchronous>, transform_indices = @transform_2, window_bounds = array<i64: 4, 36>}, {pipeline_mode = #tpu.pipeline_mode<synchronous>, transform_indices = @transform_3, window_bounds = array<i64: 4, 36>}, {transform_indices = @transform_4, window_bounds = array<i64: 1, 4, 256>}]} {
    %c0 = arith.constant 0 : index
    %c0_0 = arith.constant 0 : index
    %c0_1 = arith.constant 0 : index
    %0 = vector.load %arg1[%c0, %c0_0, %c0_1] : memref<1x4x256xf32, #tpu.memory_space<vmem>>, vector<1x4x256xf32>
    %1 = vector.shape_cast %0 : vector<1x4x256xf32> to vector<4x256xf32>
    %c0_2 = arith.constant 0 : index
    %c0_3 = arith.constant 0 : index
    %2 = vector.load %arg2[%c0_2, %c0_3] : memref<36x256xf32, #tpu.memory_space<vmem>>, vector<36x256xf32>
    %c0_4 = arith.constant 0 : index
    %c0_5 = arith.constant 0 : index
    %3 = vector.load %arg3[%c0_4, %c0_5] : memref<4x36xf32, #tpu.memory_space<vmem>>, vector<4x36xf32>
    %c0_6 = arith.constant 0 : index
    %c0_7 = arith.constant 0 : index
    %4 = vector.load %arg4[%c0_6, %c0_7] : memref<4x36xf32, #tpu.memory_space<vmem>>, vector<4x36xf32>
    %c17_i32 = arith.constant 17 : i32
    %5 = tpu.dynamic_rotate %1 by %c17_i32 dim 1 : vector<4x256xf32>, i32 -> vector<4x256xf32>
    %c16_i32 = arith.constant 16 : i32
    %6 = tpu.dynamic_rotate %1 by %c16_i32 dim 1 : vector<4x256xf32>, i32 -> vector<4x256xf32>
    %c15_i32 = arith.constant 15 : i32
    %7 = tpu.dynamic_rotate %1 by %c15_i32 dim 1 : vector<4x256xf32>, i32 -> vector<4x256xf32>
    %c1_i32 = arith.constant 1 : i32
    %8 = tpu.dynamic_rotate %1 by %c1_i32 dim 1 : vector<4x256xf32>, i32 -> vector<4x256xf32>
    %c255_i32 = arith.constant 255 : i32
    %9 = tpu.dynamic_rotate %1 by %c255_i32 dim 1 : vector<4x256xf32>, i32 -> vector<4x256xf32>
    %c241_i32 = arith.constant 241 : i32
    %10 = tpu.dynamic_rotate %1 by %c241_i32 dim 1 : vector<4x256xf32>, i32 -> vector<4x256xf32>
    %c240_i32 = arith.constant 240 : i32
    %11 = tpu.dynamic_rotate %1 by %c240_i32 dim 1 : vector<4x256xf32>, i32 -> vector<4x256xf32>
    %c239_i32 = arith.constant 239 : i32
    %12 = tpu.dynamic_rotate %1 by %c239_i32 dim 1 : vector<4x256xf32>, i32 -> vector<4x256xf32>
    %13 = tpu.concatenate %5, %6, %7, %8, %1, %9, %10, %11, %12 in 0 : vector<4x256xf32>, vector<4x256xf32>, vector<4x256xf32>, vector<4x256xf32>, vector<4x256xf32>, vector<4x256xf32>, vector<4x256xf32>, vector<4x256xf32>, vector<4x256xf32> -> vector<36x256xf32>
    %14 = arith.mulf %13, %2 : vector<36x256xf32>
    %cst = arith.constant dense<0.000000e+00> : vector<4x256xf32>
    %15 = tpu.matmul %3, %14, %cst {dimension_numbers = #tpu.dot_dimension_numbers<[1], [0], [0], [1], [0, 0, 1, 1], [], []>} : vector<4x36xf32>, vector<36x256xf32>, vector<4x256xf32> -> vector<4x256xf32>
    %cst_8 = arith.constant dense<0.000000e+00> : vector<4xf32>
    %16 = vector.multi_reduction <add>, %15, %cst_8 [1] : vector<4x256xf32> to vector<4xf32>
    %17 = vector.shape_cast %16 : vector<4xf32> to vector<4x1xf32>
    %cst_9 = arith.constant 2.560000e+02 : f32
    %18 = vector.broadcast %cst_9 : f32 to vector<4x1xf32>
    %19 = arith.divf %17, %18 : vector<4x1xf32>
    %20 = vector.broadcast %19 : vector<4x1xf32> to vector<4x256xf32>
    %21 = arith.subf %15, %20 : vector<4x256xf32>
    %22 = arith.mulf %21, %21 : vector<4x256xf32>
    %cst_10 = arith.constant dense<0.000000e+00> : vector<4xf32>
    %23 = vector.multi_reduction <add>, %22, %cst_10 [1] : vector<4x256xf32> to vector<4xf32>
    %24 = vector.shape_cast %23 : vector<4xf32> to vector<4x1xf32>
    %cst_11 = arith.constant 2.560000e+02 : f32
    %25 = vector.broadcast %cst_11 : f32 to vector<4x1xf32>
    %26 = arith.divf %24, %25 : vector<4x1xf32>
    %27 = vector.broadcast %19 : vector<4x1xf32> to vector<4x256xf32>
    %28 = arith.subf %15, %27 : vector<4x256xf32>
    %cst_12 = arith.constant 9.99999974E-6 : f32
    %29 = vector.broadcast %cst_12 : f32 to vector<4x1xf32>
    %30 = arith.addf %26, %29 : vector<4x1xf32>
    %31 = math.rsqrt %30 : vector<4x1xf32>
    %32 = vector.broadcast %31 : vector<4x1xf32> to vector<4x256xf32>
    %33 = arith.mulf %28, %32 : vector<4x256xf32>
    %cst_13 = arith.constant 0.000000e+00 : f32
    %34 = vector.broadcast %cst_13 : f32 to vector<4x256xf32>
    %35 = arith.maximumf %33, %34 : vector<4x256xf32>
    %c17_i32_14 = arith.constant 17 : i32
    %36 = tpu.dynamic_rotate %35 by %c17_i32_14 dim 1 : vector<4x256xf32>, i32 -> vector<4x256xf32>
    %c16_i32_15 = arith.constant 16 : i32
    %37 = tpu.dynamic_rotate %35 by %c16_i32_15 dim 1 : vector<4x256xf32>, i32 -> vector<4x256xf32>
    %c15_i32_16 = arith.constant 15 : i32
    %38 = tpu.dynamic_rotate %35 by %c15_i32_16 dim 1 : vector<4x256xf32>, i32 -> vector<4x256xf32>
    %c1_i32_17 = arith.constant 1 : i32
    %39 = tpu.dynamic_rotate %35 by %c1_i32_17 dim 1 : vector<4x256xf32>, i32 -> vector<4x256xf32>
    %c255_i32_18 = arith.constant 255 : i32
    %40 = tpu.dynamic_rotate %35 by %c255_i32_18 dim 1 : vector<4x256xf32>, i32 -> vector<4x256xf32>
    %c241_i32_19 = arith.constant 241 : i32
    %41 = tpu.dynamic_rotate %35 by %c241_i32_19 dim 1 : vector<4x256xf32>, i32 -> vector<4x256xf32>
    %c240_i32_20 = arith.constant 240 : i32
    %42 = tpu.dynamic_rotate %35 by %c240_i32_20 dim 1 : vector<4x256xf32>, i32 -> vector<4x256xf32>
    %c239_i32_21 = arith.constant 239 : i32
    %43 = tpu.dynamic_rotate %35 by %c239_i32_21 dim 1 : vector<4x256xf32>, i32 -> vector<4x256xf32>
    %44 = tpu.concatenate %36, %37, %38, %39, %35, %40, %41, %42, %43 in 0 : vector<4x256xf32>, vector<4x256xf32>, vector<4x256xf32>, vector<4x256xf32>, vector<4x256xf32>, vector<4x256xf32>, vector<4x256xf32>, vector<4x256xf32>, vector<4x256xf32> -> vector<36x256xf32>
    %45 = arith.mulf %44, %2 : vector<36x256xf32>
    %cst_22 = arith.constant dense<0.000000e+00> : vector<4x256xf32>
    %46 = tpu.matmul %4, %45, %cst_22 {dimension_numbers = #tpu.dot_dimension_numbers<[1], [0], [0], [1], [0, 0, 1, 1], [], []>} : vector<4x36xf32>, vector<36x256xf32>, vector<4x256xf32> -> vector<4x256xf32>
    %cst_23 = arith.constant dense<0.000000e+00> : vector<4xf32>
    %47 = vector.multi_reduction <add>, %46, %cst_23 [1] : vector<4x256xf32> to vector<4xf32>
    %48 = vector.shape_cast %47 : vector<4xf32> to vector<4x1xf32>
    %cst_24 = arith.constant 2.560000e+02 : f32
    %49 = vector.broadcast %cst_24 : f32 to vector<4x1xf32>
    %50 = arith.divf %48, %49 : vector<4x1xf32>
    %51 = vector.broadcast %50 : vector<4x1xf32> to vector<4x256xf32>
    %52 = arith.subf %46, %51 : vector<4x256xf32>
    %53 = arith.mulf %52, %52 : vector<4x256xf32>
    %cst_25 = arith.constant dense<0.000000e+00> : vector<4xf32>
    %54 = vector.multi_reduction <add>, %53, %cst_25 [1] : vector<4x256xf32> to vector<4xf32>
    %55 = vector.shape_cast %54 : vector<4xf32> to vector<4x1xf32>
    %cst_26 = arith.constant 2.560000e+02 : f32
    %56 = vector.broadcast %cst_26 : f32 to vector<4x1xf32>
    %57 = arith.divf %55, %56 : vector<4x1xf32>
    %58 = vector.broadcast %50 : vector<4x1xf32> to vector<4x256xf32>
    %59 = arith.subf %46, %58 : vector<4x256xf32>
    %cst_27 = arith.constant 9.99999974E-6 : f32
    %60 = vector.broadcast %cst_27 : f32 to vector<4x1xf32>
    %61 = arith.addf %57, %60 : vector<4x1xf32>
    %62 = math.rsqrt %61 : vector<4x1xf32>
    %63 = vector.broadcast %62 : vector<4x1xf32> to vector<4x256xf32>
    %64 = arith.mulf %59, %63 : vector<4x256xf32>
    %65 = arith.addf %64, %1 : vector<4x256xf32>
    %cst_28 = arith.constant 0.000000e+00 : f32
    %66 = vector.broadcast %cst_28 : f32 to vector<4x256xf32>
    %67 = arith.maximumf %65, %66 : vector<4x256xf32>
    %c0_29 = arith.constant 0 : index
    %c0_30 = arith.constant 0 : index
    %c0_31 = arith.constant 0 : index
    %68 = vector.load %arg5[%c0_29, %c0_30, %c0_31] : memref<1x4x256xf32, #tpu.memory_space<vmem>>, vector<1x4x256xf32>
    %69 = vector.shape_cast %68 : vector<1x4x256xf32> to vector<4x256xf32>
    %70 = vector.shape_cast %67 : vector<4x256xf32> to vector<1x4x256xf32>
    tpu.vector_store %arg5[%c0_29, %c0_30, %c0_31], %70 {strides = array<i32>} : memref<1x4x256xf32, #tpu.memory_space<vmem>>, vector<1x4x256xf32>,
    return
  }
  func.func @transform_0(%arg0: i32) -> (i32, i32, i32) {
    %c0_i32 = arith.constant 0 : i32
    %c0_i32_0 = arith.constant 0 : i32
    %c0_i32_1 = arith.constant 0 : i32
    return %arg0, %c0_i32, %c0_i32_0 : i32, i32, i32
  }
  func.func @transform_1(%arg0: i32) -> (i32, i32) {
    %c0_i32 = arith.constant 0 : i32
    %c0_i32_0 = arith.constant 0 : i32
    %c0_i32_1 = arith.constant 0 : i32
    return %c0_i32, %c0_i32_0 : i32, i32
  }
  func.func @transform_2(%arg0: i32) -> (i32, i32) {
    %c0_i32 = arith.constant 0 : i32
    %c0_i32_0 = arith.constant 0 : i32
    %c0_i32_1 = arith.constant 0 : i32
    return %c0_i32, %c0_i32_0 : i32, i32
  }
  func.func @transform_3(%arg0: i32) -> (i32, i32) {
    %c0_i32 = arith.constant 0 : i32
    %c0_i32_0 = arith.constant 0 : i32
    %c0_i32_1 = arith.constant 0 : i32
    return %c0_i32, %c0_i32_0 : i32, i32
  }
  func.func @transform_4(%arg0: i32) -> (i32, i32, i32) {
    %c0_i32 = arith.constant 0 : i32
    %c0_i32_0 = arith.constant 0 : i32
    %c0_i32_1 = arith.constant 0 : i32
    return %arg0, %c0_i32, %c0_i32_0 : i32, i32, i32
  }
}

</mosaic_0001>

<llo_original>
// kernel: tpu_custom_call.1
$region0: #{tpu_custom_call.1}
  #allocation0 [shape = 'u32[]', space=smem, size = 0x4, offset = 0x4, fixed_abs, tag = 'smem constant byte address 0x4 - core index']
  #allocation1 [shape = 'u32[144,128]{1,0:T(1,128)}', space=vmem, size = 0x12000, scoped, tag = 'internal scratch']
  %s0 = inlined_call_operand.hbm [shape: f32[2,4,256], index: 0, kind: input, shape index: {}]
  %s1 = inlined_call_operand.hbm [shape: f32[36,256], index: 1, kind: input, shape index: {}]
  %s2 = inlined_call_operand.vmem [shape: f32[4,36], index: 2, kind: input, shape index: {}]
  %s3 = inlined_call_operand.vmem [shape: f32[4,36], index: 3, kind: input, shape index: {}]
  %s4 = inlined_call_operand.hbm [shape: f32[2,4,256], index: 4, kind: output, shape index: {}]
  %s5 = sld [smem:[#allocation0]]
  $region57: #{tpu_custom_call.1} parent=0
    _
  %s7 = ssub.s32 1, %s5
  %s8 = scalar_select 0, %s7, %s5
  $region1: #{tpu_custom_call.1} parent=0
    #allocation2 [shape = 'u8[8192]{0}', space=vmem, size = 0x2000, scoped, tag = 'input window, operand 0']
    #allocation3 [shape = 's32[2]{0}', space=sflag, size = 0x8, scoped, tag = 'scoped memory for tpu_custom_call.1']
    #allocation4 [shape = 's32[2]{0}', space=sflag, size = 0x8, scoped, tag = 'scoped memory for tpu_custom_call.1']
    #allocation5 [shape = 'u8[40960]{0}', space=vmem, size = 0xa000, scoped, tag = 'input window, operand 1, single buffered']
    #allocation6 [shape = 's32[1]{0}', space=sflag, size = 0x4, scoped, tag = 'scoped memory for tpu_custom_call.1']
    #allocation7 [shape = 'u8[8192]{0}', space=vmem, size = 0x2000, scoped, tag = 'output window, operand 0']
    %9 = vsyncpa [#allocation3], 0
    %s10 = scalar_lea.sflag [#allocation3], 1
    %11 = vsyncpa %s10, 0
    %12 = vsyncpa [#allocation6], 0
    %13 = vsyncpa [#allocation4], 0
    %s14 = scalar_lea.sflag [#allocation4], 1
    %15 = vsyncpa %s14, 0
    loop: start=0, step=1, limit=4
    $region2: #{tpu_custom_call.1} parent=1 // loop_pre_header
      _
    $region3: #{tpu_custom_call.1} parent=1 // loop_header
      %s17 = sphi 0, %s21
      %p18 = scmp.ge.s32.totalorder %s17, 4
      %s27 = sphi 0, %s29
      %s30 = sphi 0, %s27
      %s31 = sphi 0, %s30
      %s47 = sphi 0, %s31
      %s51 = sphi 0, %s51
      %s53 = sphi 0, %s51
      %s54 = sphi 0, %s53
      %s68 = sphi 0, %s54
      %s72 = sphi 0, %s72
      %s74 = sphi 0, %s72
      %s75 = sphi 0, %s74
      %s89 = sphi 0, %s75
      %s93 = sphi 0, %s93
      %s95 = sphi 0, %s93
      %s96 = sphi 0, %s95
      %s110 = sphi 0, %s96
      %s116 = sphi 0, %s118
      %s119 = sphi 0, %s116
      %s120 = sphi 0, %s119
      %s136 = sphi 0, %s120
    $region4: #{tpu_custom_call.1} parent=1 // loop_header_branch
      %20 = sbr.rel (%p18) target = $region8
    $region5: #{tpu_custom_call.1} parent=1 // loop_body
      %s22 = ssub.s32 %s17, 1
      %s23 = ssub.s32 %s17, 2
      %s24 = sadd.s32 %s17, 1
      %s25 = ssub.s32 %s17, %s24
      %p26 = scmp.eq.s32.totalorder %s25, 0
      %s28 = sadd.s32 %s27, 1
      %s29 = scalar_select %p26, %s27, %s28
      %p32 = pneg %p26
      %p33 = scmp.eq.s32.totalorder %s17, 1
      %p34 = por %p32, %p33
      %p35 = scmp.ne.s32.totalorder %s27, %s30
      %p36 = scmp.eq.s32.totalorder %s17, 0
      %p37 = por %p35, %p36
      %p38 = scmp.ne.s32.totalorder %s27, %s30
      %p39 = scmp.eq.s32.totalorder %s22, 1
      %p40 = por %p38, %p39
      %p41 = scmp.ne.s32.totalorder %s30, %s31
      %p42 = scmp.eq.s32.totalorder %s22, 0
      %p43 = por %p41, %p42
      %p44 = scmp.ne.s32.totalorder %s30, %s31
      %p45 = scmp.eq.s32.totalorder %s23, 1
      %p46 = por %p44, %p45
      %p48 = scmp.ne.s32.totalorder %s31, %s47
      %p49 = scmp.eq.s32.totalorder %s23, 0
      %p50 = por %p48, %p49
      %s52 = sadd.s32 %s51, 1
      %p55 = scmp.eq.s32.totalorder %s17, 1
      %p56 = scmp.ne.s32.totalorder %s51, %s53
      %p57 = scmp.eq.s32.totalorder %s17, 0
      %p58 = por %p56, %p57
      %p59 = scmp.ne.s32.totalorder %s51, %s53
      %p60 = scmp.eq.s32.totalorder %s22, 1
      %p61 = por %p59, %p60
      %p62 = scmp.ne.s32.totalorder %s53, %s54
      %p63 = scmp.eq.s32.totalorder %s22, 0
      %p64 = por %p62, %p63
      %p65 = scmp.ne.s32.totalorder %s53, %s54
      %p66 = scmp.eq.s32.totalorder %s23, 1
      %p67 = por %p65, %p66
      %p69 = scmp.ne.s32.totalorder %s54, %s68
      %p70 = scmp.eq.s32.totalorder %s23, 0
      %p71 = por %p69, %p70
      %s73 = sadd.s32 %s72, 1
      %p76 = scmp.eq.s32.totalorder %s17, 1
      %p77 = scmp.ne.s32.totalorder %s72, %s74
      %p78 = scmp.eq.s32.totalorder %s17, 0
      %p79 = por %p77, %p78
      %p80 = scmp.ne.s32.totalorder %s72, %s74
      %p81 = scmp.eq.s32.totalorder %s22, 1
      %p82 = por %p80, %p81
      %p83 = scmp.ne.s32.totalorder %s74, %s75
      %p84 = scmp.eq.s32.totalorder %s22, 0
      %p85 = por %p83, %p84
      %p86 = scmp.ne.s32.totalorder %s74, %s75
      %p87 = scmp.eq.s32.totalorder %s23, 1
      %p88 = por %p86, %p87
      %p90 = scmp.ne.s32.totalorder %s75, %s89
      %p91 = scmp.eq.s32.totalorder %s23, 0
      %p92 = por %p90, %p91
      %s94 = sadd.s32 %s93, 1
      %p97 = scmp.eq.s32.totalorder %s17, 1
      %p98 = scmp.ne.s32.totalorder %s93, %s95
      %p99 = scmp.eq.s32.totalorder %s17, 0
      %p100 = por %p98, %p99
      %p101 = scmp.ne.s32.totalorder %s93, %s95
      %p102 = scmp.eq.s32.totalorder %s22, 1
      %p103 = por %p101, %p102
      %p104 = scmp.ne.s32.totalorder %s95, %s96
      %p105 = scmp.eq.s32.totalorder %s22, 0
      %p106 = por %p104, %p105
      %p107 = scmp.ne.s32.totalorder %s95, %s96
      %p108 = scmp.eq.s32.totalorder %s23, 1
      %p109 = por %p107, %p108
      %p111 = scmp.ne.s32.totalorder %s96, %s110
      %p112 = scmp.eq.s32.totalorder %s23, 0
      %p113 = por %p111, %p112
      %s114 = ssub.s32 %s17, %s24
      %p115 = scmp.eq.s32.totalorder %s114, 0
      %s117 = sadd.s32 %s116, 1
      %s118 = scalar_select %p115, %s116, %s117
      %p121 = pneg %p115
      %p122 = scmp.eq.s32.totalorder %s17, 1
      %p123 = por %p121, %p122
      %p124 = scmp.ne.s32.totalorder %s116, %s119
      %p125 = scmp.eq.s32.totalorder %s17, 0
      %p126 = por %p124, %p125
      %p127 = scmp.ne.s32.totalorder %s116, %s119
      %p128 = scmp.eq.s32.totalorder %s22, 1
      %p129 = por %p127, %p128
      %p130 = scmp.ne.s32.totalorder %s119, %s120
      %p131 = scmp.eq.s32.totalorder %s22, 0
      %p132 = por %p130, %p131
      %p133 = scmp.ne.s32.totalorder %s119, %s120
      %p134 = scmp.eq.s32.totalorder %s23, 1
      %p135 = por %p133, %p134
      %p137 = scmp.ne.s32.totalorder %s120, %s136
      %p138 = scmp.eq.s32.totalorder %s23, 0
      %p139 = por %p137, %p138
      %p140 = scmp.le.s32.totalorder 1, %s17
      %p141 = scmp.lt.s32.totalorder %s17, 3
      %p142 = pnand %p140, %p141
      %p143 = pneg %p142
      // Predicated region
      $region9: #{tpu_custom_call.1} parent=5 // pred_check
        _
      $region10: #{tpu_custom_call.1} parent=5 // pred_check_branch
        %145 = sbr.rel (%p142) target = $region12
      $region11: #{tpu_custom_call.1} parent=5 // pred_region
        %s146 = ssub.s32 %s17, 1
        // Predicated region
        $region13: #{tpu_custom_call.1} parent=11 // pred_check
          %p147 = pneg %p64
        $region14: #{tpu_custom_call.1} parent=11 // pred_check_branch
          %149 = sbr.rel (%p147) target = $region16
        $region15: #{tpu_custom_call.1} parent=11 // pred_region
          %s151 = ssub.s32 1280, 1280
          %152 = vsyncadd [#allocation6], %s151
          %s153 = sshll.u32 [#allocation5], 4
          %s154 = int_to_ptr.vmem [resolvable:$true] %s153
          %159 = dma.hbm_to_vmem [thread:$0]  %s1, 1280, %s154, [#allocation6], 256, 256, 16
        $region16: #{tpu_custom_call.1} parent=11 // pred_fallthru
          _
        // Predicated region
        $region17: #{tpu_custom_call.1} parent=11 // pred_check
          %p160 = pneg %p85
        $region18: #{tpu_custom_call.1} parent=11 // pred_check_branch
          %162 = sbr.rel (%p160) target = $region20
        $region19: #{tpu_custom_call.1} parent=11 // pred_region
          _
        $region20: #{tpu_custom_call.1} parent=11 // pred_fallthru
          _
        // Predicated region
        $region21: #{tpu_custom_call.1} parent=11 // pred_check
          %p163 = pneg %p106
        $region22: #{tpu_custom_call.1} parent=11 // pred_check_branch
          %165 = sbr.rel (%p163) target = $region24
        $region23: #{tpu_custom_call.1} parent=11 // pred_region
          _
        $region24: #{tpu_custom_call.1} parent=11 // pred_fallthru
          _
      $region12: #{tpu_custom_call.1} parent=5 // pred_fallthru
        _
      %p166 = scmp.lt.s32.totalorder %s17, 2
      // Predicated region
      $region25: #{tpu_custom_call.1} parent=5 // pred_check
        %p167 = pneg %p166
      $region26: #{tpu_custom_call.1} parent=5 // pred_check_branch
        %169 = sbr.rel (%p167) target = $region28
      $region27: #{tpu_custom_call.1} parent=5 // pred_region
        // Predicated region
        $region29: #{tpu_custom_call.1} parent=27 // pred_check
          %p170 = pneg %p37
        $region30: #{tpu_custom_call.1} parent=27 // pred_check_branch
          %172 = sbr.rel (%p170) target = $region32
        $region31: #{tpu_custom_call.1} parent=27 // pred_region
          %s173 = sand.u32 %s27, 1
          %s174 = scalar_lea.sflag [#allocation3], %s173
          %s175 = sand.u32 %s27, 1
          %s176 = smul.addr %s175, 8
          %s177 = scalar_lea.vmem [#allocation2], %s176
          %s179 = ssub.s32 128, 128
          %180 = vsyncadd %s174, %s179
          %s181 = smul.addr %s17, 2
          %s182 = smul.addr %s181, 64
          %s183 = scalar_lea.hbm %s0, %s182
          %s185 = sshll.u32 %s177, 4
          %s186 = int_to_ptr.vmem [resolvable:$true] %s185
          %188 = dma.hbm_to_vmem [thread:$0]  %s183, 128, %s186, %s174
        $region32: #{tpu_custom_call.1} parent=27 // pred_fallthru
          _
      $region28: #{tpu_custom_call.1} parent=5 // pred_fallthru
        _
      %p189 = scmp.le.s32.totalorder 1, %s17
      %p190 = scmp.lt.s32.totalorder %s17, 3
      %p191 = pnand %p189, %p190
      %p192 = pneg %p191
      // Predicated region
      $region33: #{tpu_custom_call.1} parent=5 // pred_check
        _
      $region34: #{tpu_custom_call.1} parent=5 // pred_check_branch
        %194 = sbr.rel (%p191) target = $region36
      $region35: #{tpu_custom_call.1} parent=5 // pred_region
        %s195 = ssub.s32 %s17, 1
        %s196 = sand.u32 %s30, 1
        %s197 = scalar_lea.sflag [#allocation3], %s196
        %s198 = sand.u32 %s30, 1
        %s199 = smul.addr %s198, 8
        %s200 = scalar_lea.vmem [#allocation2], %s199
        // Predicated region
        $region37: #{tpu_custom_call.1} parent=35 // pred_check
          %p201 = pneg %p43
        $region38: #{tpu_custom_call.1} parent=35 // pred_check_branch
          %203 = sbr.rel (%p201) target = $region40
        $region39: #{tpu_custom_call.1} parent=35 // pred_region
          %204 = dma.done %s197, 128
        $region40: #{tpu_custom_call.1} parent=35 // pred_fallthru
          _
        // Predicated region
        $region41: #{tpu_custom_call.1} parent=35 // pred_check
          %p205 = pneg %p64
        $region42: #{tpu_custom_call.1} parent=35 // pred_check_branch
          %207 = sbr.rel (%p205) target = $region44
        $region43: #{tpu_custom_call.1} parent=35 // pred_region
          %208 = dma.done [#allocation6], 1280
        $region44: #{tpu_custom_call.1} parent=35 // pred_fallthru
          _
        %s209 = sand.u32 %s30, 1
        %s210 = scalar_lea.sflag [#allocation3], %s209
        %s211 = sand.u32 %s30, 1
        %s212 = smul.addr %s211, 8
        %s213 = scalar_lea.vmem [#allocation2], %s212
        %p214 = pneg %p43
        %p215 = pneg %p40
        %p216 = pneg %p64
        %p217 = pneg %p61
        %p218 = pneg %p85
        %p219 = pneg %p82
        %p220 = pneg %p106
        %p221 = pneg %p103
        %p222 = pneg %p132
        %p223 = pneg %p129
        %s224 = sand.u32 %s119, 1
        %s225 = scalar_lea.sflag [#allocation4], %s224
        %s226 = sand.u32 %s119, 1
        %s227 = smul.addr %s226, 8
        %s228 = scalar_lea.vmem [#allocation7], %s227
        %v229 = vld [vmem:[%s200] sm:$0xff]
        %v230 = vld [vmem:[#allocation5] sm:$0xff]
        %v231 = vld [vmem:[#allocation5 + $0x8] sm:$0xff]
        %v232 = vld [vmem:[#allocation5 + $0x10] sm:$0xff]
        %v233 = vld [vmem:[#allocation5 + $0x18] sm:$0xff]
        %v234 = vld [vmem:[#allocation5 + $0x20] sm:$0xff]
        %v235 = vld [vmem:[#allocation5 + $0x28] sm:$0xff]
        %v236 = vld [vmem:[#allocation5 + $0x30] sm:$0xff]
        %v237 = vld [vmem:[#allocation5 + $0x38] sm:$0xff]
        %v238 = vld [vmem:[#allocation5 + $0x40] sm:$0xf]
        %v239 = vld [vmem:[#allocation5 + $0x48] sm:$0xf]
        %v240 = vld [vmem:[%s2] sm:$0xf]
        %v241 = vld [vmem:[%s3] sm:$0xf]
        %v243 = vcombine.high %v229, %v229
        %245 = vrot.lane.b32.xlu0 %v229, 17
        %v246 = vpop.permute.xlu0 %245
        %247 = vrot.lane.b32.xlu0 %v243, 17
        %v248 = vpop.permute.xlu0 %247
        %v249 = vlaneseq
        %v250 = vand.u32 %v249, 127
        %vm251 = vcmp.lt.s32.totalorder %v250, 17
        %v252 = vsel %vm251, %v246, %v248
        %v253 = vsel %vm251, %v248, %v246
        %254 = vrot.lane.b32.xlu0 %v229, 16
        %v255 = vpop.permute.xlu0 %254
        %256 = vrot.lane.b32.xlu0 %v243, 16
        %v257 = vpop.permute.xlu0 %256
        %vm258 = vcmp.lt.s32.totalorder %v250, 16
        %v259 = vsel %vm258, %v255, %v257
        %v260 = vsel %vm258, %v257, %v255
        %261 = vrot.lane.b32.xlu0 %v229, 15
        %v262 = vpop.permute.xlu0 %261
        %263 = vrot.lane.b32.xlu0 %v243, 15
        %v264 = vpop.permute.xlu0 %263
        %vm265 = vcmp.lt.s32.totalorder %v250, 15
        %v266 = vsel %vm265, %v262, %v264
        %v267 = vsel %vm265, %v264, %v262
        %268 = vrot.lane.b32.xlu0 %v229, 1
        %v269 = vpop.permute.xlu0 %268
        %270 = vrot.lane.b32.xlu0 %v243, 1
        %v271 = vpop.permute.xlu0 %270
        %vm272 = vcmp.lt.s32.totalorder %v250, 1
        %v273 = vsel %vm272, %v269, %v271
        %v274 = vsel %vm272, %v271, %v269
        %275 = vrot.lane.b32.xlu0 %v229, 127
        %v276 = vpop.permute.xlu0 %275
        %277 = vrot.lane.b32.xlu0 %v243, 127
        %v278 = vpop.permute.xlu0 %277
        %vm279 = vcmp.lt.s32.totalorder %v250, 127
        %v280 = vsel %vm279, %v276, %v278
        %v281 = vsel %vm279, %v278, %v276
        %282 = vrot.lane.b32.xlu0 %v229, 113
        %v283 = vpop.permute.xlu0 %282
        %284 = vrot.lane.b32.xlu0 %v243, 113
        %v285 = vpop.permute.xlu0 %284
        %vm286 = vcmp.lt.s32.totalorder %v250, 113
        %v287 = vsel %vm286, %v283, %v285
        %v288 = vsel %vm286, %v285, %v283
        %289 = vrot.lane.b32.xlu0 %v229, 112
        %v290 = vpop.permute.xlu0 %289
        %291 = vrot.lane.b32.xlu0 %v243, 112
        %v292 = vpop.permute.xlu0 %291
        %vm293 = vcmp.lt.s32.totalorder %v250, 112
        %v294 = vsel %vm293, %v290, %v292
        %v295 = vsel %vm293, %v292, %v290
        %296 = vrot.lane.b32.xlu0 %v229, 111
        %v297 = vpop.permute.xlu0 %296
        %298 = vrot.lane.b32.xlu0 %v243, 111
        %v299 = vpop.permute.xlu0 %298
        %vm300 = vcmp.lt.s32.totalorder %v250, 111
        %v301 = vsel %vm300, %v297, %v299
        %v302 = vsel %vm300, %v299, %v297
        %v305 = vrot.slane %v260, 4
        %v306 = vrot.slane %v259, 4
        %v311 = vrot.slane %v274, 4
        %v312 = vrot.slane %v273, 4
        %v317 = vrot.slane %v280, 4
        %v318 = vrot.slane %v281, 4
        %v323 = vrot.slane %v294, 4
        %v324 = vrot.slane %v295, 4
        %vm327 = vcmask 1043456
        %v328 = vsel %vm327, %v253, %v305
        %v329 = vsel %vm327, %v252, %v306
        %v330 = vsel %vm327, %v267, %v311
        %v331 = vsel %vm327, %v266, %v312
        %v332 = vsel %vm327, %v229, %v317
        %v333 = vsel %vm327, %v243, %v318
        %v334 = vsel %vm327, %v287, %v323
        %v335 = vsel %vm327, %v288, %v324
        %v336 = vmul.f32 %v328, %v230
        %v337 = vmul.f32 %v329, %v231
        %v338 = vmul.f32 %v330, %v232
        %v339 = vmul.f32 %v331, %v233
        %v340 = vmul.f32 %v332, %v234
        %v341 = vmul.f32 %v333, %v235
        %v342 = vmul.f32 %v334, %v236
        %v343 = vmul.f32 %v335, %v237
        %v344 = vmul.f32 %v301, %v238
        %v345 = vmul.f32 %v302, %v239
        %vm346 = vcmask 293888
        %v348 = vsel %vm346, %v240, 0
        %v351 = vsel %vm327, %v344, 0
        %v354 = vsel %vm327, %v345, 0
        %356 = vmatprep.subr.mxu0 %v337
        %357 = vmatpush1.msra.mxu0 %v336
        %358 = vmatprep.subr.mxu0 %v339
        %359 = vmatpush1.msra.mxu0 %v338
        %360 = vmatprep.subr.mxu0 %v341
        %361 = vmatpush1.msra.mxu0 %v340
        %362 = vmatprep.subr.mxu0 %v343
        %363 = vmatpush1.msra.mxu0 %v342
        %364 = vmatprep.subr.mxu0 %v354
        %365 = vmatpush1.msra.mxu0 %v351
        %366 = vmatprep.subr.mxu0 0.0
        %367 = vmatpush1.msra.mxu0 0.0
        %368 = vmatprep.subr.mxu0 0.0
        %369 = vmatpush1.msra.mxu0 0.0
        %370 = vmatprep.subr.mxu0 0.0
        %371 = vmatpush1.msra.mxu0 0.0
        %372 = vmatprep.subr.mxu0 0.0
        %373 = vmatpush1.msra.mxu0 0.0
        %374 = vmatprep.subr.mxu0 0.0
        %375 = vmatpush1.msra.mxu0 0.0
        %376 = vmatprep.subr.mxu0 0.0
        %377 = vmatpush1.msra.mxu0 0.0
        %378 = vmatprep.subr.mxu0 0.0
        %379 = vmatpush1.msra.mxu0 0.0
        %380 = vmatprep.subr.mxu0 0.0
        %381 = vmatpush1.msra.mxu0 0.0
        %382 = vmatprep.subr.mxu0 0.0
        %383 = vmatpush1.msra.mxu0 0.0
        %384 = vmatprep.subr.mxu0 0.0
        %385 = vmatpush1.msra.mxu0 0.0
        %386 = vmatprep.subr.mxu0 0.0
        %387 = vmatpush1.msra.mxu0 0.0
        %388 = vmatprep.subr.mxu0 0.0
        %389 = vmatpush1.msra.mxu0 0.0
        %390 = vmatprep.subr.mxu0 0.0
        %391 = vmatpush1.msra.mxu0 0.0
        %392 = vmatprep.subr.mxu0 0.0
        %393 = vmatpush1.msra.mxu0 0.0
        %394 = vmatprep.subr.mxu0 0.0
        %395 = vmatpush1.msra.mxu0 0.0
        %396 = vmatprep.subr.mxu0 0.0
        %397 = vmatpush1.msra.mxu0 0.0
        %398 = vmatprep.subr.mxu0 0.0
        %399 = vmatpush1.msra.mxu0 0.0
        %400 = vmatprep.subr.mxu0 0.0
        %401 = vmatpush1.msra.mxu0 0.0
        %402 = vmatprep.subr.mxu0 0.0
        %403 = vmatpush1.msra.mxu0 0.0
        %404 = vmatprep.subr.mxu0 0.0
        %405 = vmatpush1.msra.mxu0 0.0
        %406 = vmatprep.subr.mxu0 0.0
        %407 = vmatpush1.msra.mxu0 0.0
        %408 = vmatprep.subr.mxu0 0.0
        %409 = vmatpush1.msra.mxu0 0.0
        %410 = vmatprep.subr.mxu0 0.0
        %411 = vmatpush1.msra.mxu0 0.0
        %412 = vmatprep.subr.mxu0 0.0
        %413 = vmatpush1.msra.mxu0 0.0
        %414 = vmatprep.subr.mxu0 0.0
        %415 = vmatpush1.msra.mxu0 0.0
        %416 = vmatprep.subr.mxu0 0.0
        %417 = vmatpush1.msra.mxu0 0.0
        %418 = vmatprep.subr.mxu0 0.0
        %419 = vmatpush1.msra.mxu0 0.0
        %420 = vmatprep.mubr.f32.mxu0 0.0
        %421 = vmatmul.mubr.f32.gmra.mrb[0].mxu0 %v348
        %v422 = vpop.f32.mrb[0].mxu0
        %v423 = vadd.f32 0.0, %v422
        %v424 = vpop.f32.mrb[0].mxu0
        %v425 = vadd.f32 0.0, %v424
        %426 = vdwg.mxu0
        %v427 = vsel %vm327, %v423, 0.0
        %v428 = vsel %vm327, %v425, 0.0
        %v429 = vadd.f32 %v427, %v428
        %430 = vadd.xlane.f32.xlu0 %v429
        %v431 = vpop.xlane.xlu0 %430
        %v432 = vrcp.pop 256.0
        %v433 = vmul.f32 %v431, %v432
        %v434 = vsub.f32 %v423, %v433
        %v435 = vsub.f32 %v425, %v433
        %v436 = vmul.f32 %v434, %v434
        %v437 = vmul.f32 %v435, %v435
        %v438 = vsel %vm327, %v436, 0.0
        %v439 = vsel %vm327, %v437, 0.0
        %v440 = vadd.f32 %v438, %v439
        %441 = vadd.xlane.f32.xlu0 %v440
        %v442 = vpop.xlane.xlu0 %441
        %v443 = vmul.f32 %v442, %v432
        %v444 = vadd.f32 %v443, 1e-05
        %v445 = vrsqrt.pop %v444
        %v446 = vmul.f32 %v434, %v445
        %v447 = vmul.f32 %v435, %v445
        %v448 = vmax.f32 %v446, 0.0
        %v449 = vmax.f32 %v447, 0.0
        %450 = vrot.lane.b32.xlu0 %v448, 17
        %v451 = vpop.permute.xlu0 %450
        %452 = vrot.lane.b32.xlu0 %v449, 17
        %v453 = vpop.permute.xlu0 %452
        %v454 = vsel %vm251, %v451, %v453
        %v455 = vsel %vm251, %v453, %v451
        %456 = vrot.lane.b32.xlu0 %v448, 16
        %v457 = vpop.permute.xlu0 %456
        %458 = vrot.lane.b32.xlu0 %v449, 16
        %v459 = vpop.permute.xlu0 %458
        %v460 = vsel %vm258, %v457, %v459
        %v461 = vsel %vm258, %v459, %v457
        %462 = vrot.lane.b32.xlu0 %v448, 15
        %v463 = vpop.permute.xlu0 %462
        %464 = vrot.lane.b32.xlu0 %v449, 15
        %v465 = vpop.permute.xlu0 %464
        %v466 = vsel %vm265, %v463, %v465
        %v467 = vsel %vm265, %v465, %v463
        %468 = vrot.lane.b32.xlu0 %v448, 1
        %v469 = vpop.permute.xlu0 %468
        %470 = vrot.lane.b32.xlu0 %v449, 1
        %v471 = vpop.permute.xlu0 %470
        %v472 = vsel %vm272, %v469, %v471
        %v473 = vsel %vm272, %v471, %v469
        %474 = vrot.lane.b32.xlu0 %v448, 127
        %v475 = vpop.permute.xlu0 %474
        %476 = vrot.lane.b32.xlu0 %v449, 127
        %v477 = vpop.permute.xlu0 %476
        %v478 = vsel %vm279, %v475, %v477
        %v479 = vsel %vm279, %v477, %v475
        %480 = vrot.lane.b32.xlu0 %v448, 113
        %v481 = vpop.permute.xlu0 %480
        %482 = vrot.lane.b32.xlu0 %v449, 113
        %v483 = vpop.permute.xlu0 %482
        %v484 = vsel %vm286, %v481, %v483
        %v485 = vsel %vm286, %v483, %v481
        %486 = vrot.lane.b32.xlu0 %v448, 112
        %v487 = vpop.permute.xlu0 %486
        %488 = vrot.lane.b32.xlu0 %v449, 112
        %v489 = vpop.permute.xlu0 %488
        %v490 = vsel %vm293, %v487, %v489
        %v491 = vsel %vm293, %v489, %v487
        %492 = vrot.lane.b32.xlu0 %v448, 111
        %v493 = vpop.permute.xlu0 %492
        %494 = vrot.lane.b32.xlu0 %v449, 111
        %v495 = vpop.permute.xlu0 %494
        %v496 = vsel %vm300, %v493, %v495
        %v497 = vsel %vm300, %v495, %v493
        %v500 = vrot.slane %v461, 4
        %v501 = vrot.slane %v460, 4
        %v506 = vrot.slane %v473, 4
        %v507 = vrot.slane %v472, 4
        %v512 = vrot.slane %v478, 4
        %v513 = vrot.slane %v479, 4
        %v518 = vrot.slane %v490, 4
        %v519 = vrot.slane %v491, 4
        %v522 = vsel %vm327, %v455, %v500
        %v523 = vsel %vm327, %v454, %v501
        %v524 = vsel %vm327, %v467, %v506
        %v525 = vsel %vm327, %v466, %v507
        %v526 = vsel %vm327, %v448, %v512
        %v527 = vsel %vm327, %v449, %v513
        %v528 = vsel %vm327, %v484, %v518
        %v529 = vsel %vm327, %v485, %v519
        %v530 = vmul.f32 %v522, %v230
        %v531 = vmul.f32 %v523, %v231
        %v532 = vmul.f32 %v524, %v232
        %v533 = vmul.f32 %v525, %v233
        %v534 = vmul.f32 %v526, %v234
        %v535 = vmul.f32 %v527, %v235
        %v536 = vmul.f32 %v528, %v236
        %v537 = vmul.f32 %v529, %v237
        %v538 = vmul.f32 %v496, %v238
        %v539 = vmul.f32 %v497, %v239
        %v541 = vsel %vm346, %v241, 0
        %v544 = vsel %vm327, %v538, 0
        %v547 = vsel %vm327, %v539, 0
        %549 = vmatprep.subr.mxu0 %v531
        %550 = vmatpush1.msra.mxu0 %v530
        %551 = vmatprep.subr.mxu0 %v533
        %552 = vmatpush1.msra.mxu0 %v532
        %553 = vmatprep.subr.mxu0 %v535
        %554 = vmatpush1.msra.mxu0 %v534
        %555 = vmatprep.subr.mxu0 %v537
        %556 = vmatpush1.msra.mxu0 %v536
        %557 = vmatprep.subr.mxu0 %v547
        %558 = vmatpush1.msra.mxu0 %v544
        %559 = vmatprep.subr.mxu0 0.0
        %560 = vmatpush1.msra.mxu0 0.0
        %561 = vmatprep.subr.mxu0 0.0
        %562 = vmatpush1.msra.mxu0 0.0
        %563 = vmatprep.subr.mxu0 0.0
        %564 = vmatpush1.msra.mxu0 0.0
        %565 = vmatprep.subr.mxu0 0.0
        %566 = vmatpush1.msra.mxu0 0.0
        %567 = vmatprep.subr.mxu0 0.0
        %568 = vmatpush1.msra.mxu0 0.0
        %569 = vmatprep.subr.mxu0 0.0
        %570 = vmatpush1.msra.mxu0 0.0
        %571 = vmatprep.subr.mxu0 0.0
        %572 = vmatpush1.msra.mxu0 0.0
        %573 = vmatprep.subr.mxu0 0.0
        %574 = vmatpush1.msra.mxu0 0.0
        %575 = vmatprep.subr.mxu0 0.0
        %576 = vmatpush1.msra.mxu0 0.0
        %577 = vmatprep.subr.mxu0 0.0
        %578 = vmatpush1.msra.mxu0 0.0
        %579 = vmatprep.subr.mxu0 0.0
        %580 = vmatpush1.msra.mxu0 0.0
        %581 = vmatprep.subr.mxu0 0.0
        %582 = vmatpush1.msra.mxu0 0.0
        %583 = vmatprep.subr.mxu0 0.0
        %584 = vmatpush1.msra.mxu0 0.0
        %585 = vmatprep.subr.mxu0 0.0
        %586 = vmatpush1.msra.mxu0 0.0
        %587 = vmatprep.subr.mxu0 0.0
        %588 = vmatpush1.msra.mxu0 0.0
        %589 = vmatprep.subr.mxu0 0.0
        %590 = vmatpush1.msra.mxu0 0.0
        %591 = vmatprep.subr.mxu0 0.0
        %592 = vmatpush1.msra.mxu0 0.0
        %593 = vmatprep.subr.mxu0 0.0
        %594 = vmatpush1.msra.mxu0 0.0
        %595 = vmatprep.subr.mxu0 0.0
        %596 = vmatpush1.msra.mxu0 0.0
        %597 = vmatprep.subr.mxu0 0.0
        %598 = vmatpush1.msra.mxu0 0.0
        %599 = vmatprep.subr.mxu0 0.0
        %600 = vmatpush1.msra.mxu0 0.0
        %601 = vmatprep.subr.mxu0 0.0
        %602 = vmatpush1.msra.mxu0 0.0
        %603 = vmatprep.subr.mxu0 0.0
        %604 = vmatpush1.msra.mxu0 0.0
        %605 = vmatprep.subr.mxu0 0.0
        %606 = vmatpush1.msra.mxu0 0.0
        %607 = vmatprep.subr.mxu0 0.0
        %608 = vmatpush1.msra.mxu0 0.0
        %609 = vmatprep.subr.mxu0 0.0
        %610 = vmatpush1.msra.mxu0 0.0
        %611 = vmatprep.subr.mxu0 0.0
        %612 = vmatpush1.msra.mxu0 0.0
        %613 = vmatprep.mubr.f32.mxu0 0.0
        %614 = vmatmul.mubr.f32.gmra.mrb[0].mxu0 %v541
        %v615 = vpop.f32.mrb[0].mxu0
        %v616 = vadd.f32 0.0, %v615
        %v617 = vpop.f32.mrb[0].mxu0
        %v618 = vadd.f32 0.0, %v617
        %619 = vdwg.mxu0
        %v620 = vsel %vm327, %v616, 0.0
        %v621 = vsel %vm327, %v618, 0.0
        %v622 = vadd.f32 %v620, %v621
        %623 = vadd.xlane.f32.xlu0 %v622
        %v624 = vpop.xlane.xlu0 %623
        %v625 = vmul.f32 %v624, %v432
        %v626 = vsub.f32 %v616, %v625
        %v627 = vsub.f32 %v618, %v625
        %v628 = vmul.f32 %v626, %v626
        %v629 = vmul.f32 %v627, %v627
        %v630 = vsel %vm327, %v628, 0.0
        %v631 = vsel %vm327, %v629, 0.0
        %v632 = vadd.f32 %v630, %v631
        %633 = vadd.xlane.f32.xlu0 %v632
        %v634 = vpop.xlane.xlu0 %633
        %v635 = vmul.f32 %v634, %v432
        %v636 = vadd.f32 %v635, 1e-05
        %v637 = vrsqrt.pop %v636
        %v638 = vmul.f32 %v626, %v637
        %v639 = vmul.f32 %v627, %v637
        %v640 = vadd.f32 %v638, %v229
        %v641 = vadd.f32 %v639, %v243
        %v642 = vmax.f32 %v640, 0.0
        %v643 = vmax.f32 %v641, 0.0
        %v646 = vcombine.low %v642, %v643
        %648 = vst [vmem:[%s228] sm:$0xff] %v646
        %s649 = sand.u32 %s119, 1
        %s650 = scalar_lea.sflag [#allocation4], %s649
        %s651 = sand.u32 %s119, 1
        %s652 = smul.addr %s651, 8
        %s653 = scalar_lea.vmem [#allocation7], %s652
        // Predicated region
        $region45: #{tpu_custom_call.1} parent=35 // pred_check
          %p654 = pneg %p129
        $region46: #{tpu_custom_call.1} parent=35 // pred_check_branch
          %656 = sbr.rel (%p654) target = $region48
        $region47: #{tpu_custom_call.1} parent=35 // pred_region
          %s658 = ssub.s32 128, 128
          %659 = vsyncadd %s650, %s658
          %s660 = smul.addr %s22, 2
          %s661 = smul.addr %s660, 64
          %s662 = scalar_lea.hbm %s4, %s661
          %s664 = sshll.u32 %s653, 4
          %s665 = int_to_ptr.vmem [resolvable:$true] %s664
          %667 = dma.vmem_to_hbm [thread:$0]  %s665, 128, %s662, %s650
        $region48: #{tpu_custom_call.1} parent=35 // pred_fallthru
          _
      $region36: #{tpu_custom_call.1} parent=5 // pred_fallthru
        _
      %p668 = scmp.le.s32.totalorder 2, %s17
      // Predicated region
      $region49: #{tpu_custom_call.1} parent=5 // pred_check
        %p669 = pneg %p668
      $region50: #{tpu_custom_call.1} parent=5 // pred_check_branch
        %671 = sbr.rel (%p669) target = $region52
      $region51: #{tpu_custom_call.1} parent=5 // pred_region
        %s672 = ssub.s32 %s17, 2
        // Predicated region
        $region53: #{tpu_custom_call.1} parent=51 // pred_check
          %p673 = pneg %p135
        $region54: #{tpu_custom_call.1} parent=51 // pred_check_branch
          %675 = sbr.rel (%p673) target = $region56
        $region55: #{tpu_custom_call.1} parent=51 // pred_region
          %s676 = sand.u32 %s120, 1
          %s677 = scalar_lea.sflag [#allocation4], %s676
          %s678 = sand.u32 %s120, 1
          %s679 = smul.addr %s678, 8
          %s680 = scalar_lea.vmem [#allocation7], %s679
          %681 = dma.done %s677, 128
        $region56: #{tpu_custom_call.1} parent=51 // pred_fallthru
          _
      $region52: #{tpu_custom_call.1} parent=5 // pred_fallthru
        _
    $region6: #{tpu_custom_call.1} parent=1 // loop_footer
      %s21 = sadd.s32 1, %s17
    $region7: #{tpu_custom_call.1} parent=1 // loop_footer_branch
      %16 = sbr.rel target = $region3
    $region8: #{tpu_custom_call.1} parent=1 // loop_exit
      _
    %682 = vsyncpa [#allocation3], 1
    %s683 = scalar_lea.sflag [#allocation3], 1
    %684 = vsyncpa %s683, 1
    %685 = vsyncpa [#allocation6], 1
    %686 = vsyncpa [#allocation4], 1
    %s687 = scalar_lea.sflag [#allocation4], 1
    %688 = vsyncpa %s687, 1

</llo_original>
